<compile_context>
chip_gen: v5e
topology: v5e:2x2
jax: 0.10.0
libtpu: 0.0.40
codegen_flags: <defaults>
</compile_context>

<pallas_src>
import functools

import numpy as np
import jax
import jax.numpy as jnp
from jax import lax
from jax.experimental import pallas as pl
from jax.experimental.pallas import tpu as pltpu


def _round_up(x, m):
    return (x + m - 1) // m * m


# -----------------------------------------------------------------------------
# Path 1: small vocab -- whole table resident in VMEM, gather as one-hot matmul.
# -----------------------------------------------------------------------------
def _onehot_kernel(x_ref, table_ref, out_ref):
    """x_ref: (TB, F) int32 (offsets folded in); table_ref: (V, D); out_ref: (TB, F*D)."""
    tb, num_fields = x_ref.shape
    V, D = table_ref.shape
    col = lax.broadcasted_iota(jnp.int32, (tb, V), 1)
    table = table_ref[...]
    # num_fields is small: static unrolled per-field MXU matmuls, each writing
    # an adjacent D-lane slice of the lane-dense (TB, F*D) output block.
    # Padded rows carry idx == V (out of range) -> all-zero one-hot -> zero row.
    for f in range(num_fields):
        onehot = (x_ref[:, f:f + 1] == col).astype(table.dtype)
        piece = jnp.dot(onehot, table, preferred_element_type=jnp.float32)
        out_ref[:, f * D:(f + 1) * D] = piece.astype(out_ref.dtype)


def _batch_tile(batch):
    """Multiple-of-8 batch tile; >= 2 grid steps once batch >= 16 (v7x megacore)."""
    if batch < 16:
        return _round_up(max(batch, 1), 8)
    return min(256, _round_up(pl.cdiv(batch, 2), 8))


def _features_embedding_onehot(x_idx, table):
    B, F = x_idx.shape
    V, D = table.shape
    itemsize = np.dtype(table.dtype).itemsize

    tile = _batch_tile(B)
    B_pad = _round_up(B, tile)
    if B_pad != B:
        # Pad with an out-of-range index: one-hot row is all zero, sliced off below.
        pad = jnp.full((B_pad - B, F), V, dtype=jnp.int32)
        x_idx = jnp.concatenate([x_idx, pad], axis=0)

    # Explicit scoped-VMEM budget: double-buffered table / index / output blocks
    # plus the (tile, V) iota + one-hot intermediates.  (The table block index
    # is constant so it is only fetched once, but pipelining still allocates
    # two buffers -- accounted for here and in the path gate.)
    need = (2 * V * D * itemsize
            + 2 * tile * F * 4
            + 2 * tile * F * D * itemsize
            + 2 * tile * V * 4
            + tile * D * 4)
    vmem_limit = int(min(48 * 2**20, max(16 * 2**20, 2 * need)))

    out_flat = pl.pallas_call(
        _onehot_kernel,
        out_shape=jax.ShapeDtypeStruct((B_pad, F * D), table.dtype),
        grid=(B_pad // tile,),
        in_specs=[
            pl.BlockSpec((tile, F), lambda i: (i, 0)),
            pl.BlockSpec((V, D), lambda i: (0, 0)),   # small table, resident
        ],
        out_specs=pl.BlockSpec((tile, F * D), lambda i: (i, 0)),
        compiler_params=pltpu.CompilerParams(
            dimension_semantics=("parallel",),
            vmem_limit_bytes=vmem_limit,
        ),
    )(x_idx, table)
    return out_flat[:B].reshape(B, F, D)


# -----------------------------------------------------------------------------
# Path 2: large vocab -- table stays in HBM, per-row DMA gather with
# scalar-prefetched indices and depth-2 DMA overlap.
# -----------------------------------------------------------------------------
def _gather_kernel(idx_ref, table_hbm, out_ref, sem, *, tile_r):
    """idx_ref: SMEM (rows_pad,) int32; table_hbm: HBM (V, D); out_ref: (tile_r, D)."""
    base = pl.program_id(0) * tile_r

    def row_copy(r):
        idx = idx_ref[base + r]
        return pltpu.make_async_copy(
            table_hbm.at[pl.ds(idx, 1), :],
            out_ref.at[pl.ds(r, 1), :],
            sem.at[r % 2])

    row_copy(0).start()

    def body(r, carry):
        @pl.when(r + 1 < tile_r)
        def _():
            row_copy(r + 1).start()      # prefetch next row while waiting on this one
        row_copy(r).wait()
        return carry

    lax.fori_loop(0, tile_r, body, 0)


def _features_embedding_gather(x_idx, table):
    B, F = x_idx.shape
    V, D = table.shape
    rows = B * F

    tile_r = min(128, _round_up(rows, 8))
    rows_pad = _round_up(rows, tile_r)

    idx_flat = x_idx.reshape(rows)
    if rows_pad != rows:
        # Pad with a valid row (0): the DMA stays in bounds; padded rows sliced off.
        idx_flat = jnp.concatenate(
            [idx_flat, jnp.zeros((rows_pad - rows,), dtype=jnp.int32)])

    out_flat = pl.pallas_call(
        functools.partial(_gather_kernel, tile_r=tile_r),
        out_shape=jax.ShapeDtypeStruct((rows_pad, D), table.dtype),
        grid_spec=pltpu.PrefetchScalarGridSpec(
            num_scalar_prefetch=1,
            grid=(rows_pad // tile_r,),
            in_specs=[pl.BlockSpec(memory_space=pl.ANY)],   # table stays in HBM
            out_specs=pl.BlockSpec((tile_r, D), lambda i, idx: (i, 0)),
            scratch_shapes=[pltpu.SemaphoreType.DMA((2,))],
        ),
        compiler_params=pltpu.CompilerParams(
            dimension_semantics=("arbitrary",),
        ),
    )(idx_flat, table)
    return out_flat[:rows].reshape(B, F, D)


# -----------------------------------------------------------------------------
# Dispatcher (matches torch FeaturesEmbedding.forward semantics).
# -----------------------------------------------------------------------------
def features_embedding(x, offsets, table, force_path=None):
    """x: (B, F) int, offsets: (F,) int, table: (V, D) float -> (B, F, D) float."""
    V, D = table.shape
    # Fold the per-field offset into the indices in the wrapper: single index
    # stream into the kernel (the add itself is negligible either way).
    x_idx = x.astype(jnp.int32) + offsets.astype(jnp.int32)[None, :]

    itemsize = np.dtype(table.dtype).itemsize
    # Gate: keep the resident one-hot path only while the double-buffered table
    # is far below the smallest scoped-VMEM budget (16 MiB default on v5e,
    # 32 MiB on v6e/v7x; v7x has only 64 MiB physical VMEM).
    small_table = (V <= 2048) and (2 * V * D * itemsize <= 8 * 2**20)
    path = force_path or ("onehot" if small_table else "gather")
    if path == "onehot":
        return _features_embedding_onehot(x_idx, table)
    return _features_embedding_gather(x_idx, table)


if __name__ == "__main__":
    # Module config (small, consistent with the forward):
    field_dims = (3, 5, 7, 4)          # num_fields = 4, vocab = sum = 19
    embed_dim = 32                     # F * D = 128 -> lane-dense output blocks
    batch = 8

    vocab = int(sum(field_dims))
    offsets = jnp.asarray(
        np.array((0, *np.cumsum(field_dims)[:-1]), dtype=np.int32))

    key = jax.random.PRNGKey(0)
    k_tab, k_x = jax.random.split(key)
    # Deterministic "weights" (nn.Embedding default init is N(0,1)).
    table = jax.random.normal(k_tab, (vocab, embed_dim), dtype=jnp.float32)
    # Per-field indices in [0, field_dims[f])
    maxs = jnp.array(field_dims, dtype=jnp.int32)[None, :]          # (1, F)
    x = (jax.random.randint(k_x, (batch, len(field_dims)), 0, 10_000) % maxs).astype(jnp.int32)

    # Reference (plain JAX gather == nn.Embedding lookup after offset add).
    ref = jnp.take(table, x + offsets[None, :], axis=0)

    # Small-vocab path: whole table resident, one-hot MXU gather.
    out = jax.block_until_ready(features_embedding(x, offsets, table))
    assert out.shape == (batch, len(field_dims), embed_dim)
    np.testing.assert_allclose(np.asarray(out), np.asarray(ref), rtol=1e-6, atol=1e-6)

    # Production path: HBM-resident table, scalar-prefetched-index DMA row gather.
    out_g = jax.block_until_ready(
        features_embedding(x, offsets, table, force_path="gather"))
    np.testing.assert_allclose(np.asarray(out_g), np.asarray(ref), rtol=1e-6, atol=1e-6)

    print("KERNEL_OK")
</pallas_src>

<mosaic_0001>
module attributes {stable_mosaic.version = 11 : i64} {
  func.func @_onehot_kernel(%arg0: i32, %arg1: memref<8x4xi32, #tpu.memory_space<vmem>>, %arg2: memref<19x32xf32, #tpu.memory_space<vmem>>, %arg3: memref<8x128xf32, #tpu.memory_space<vmem>>) attributes {dimension_semantics = [#tpu.dimension_semantics<parallel>], iteration_bounds = array<i64: 1>, scalar_prefetch = 0 : i64, scratch_operands = 0 : i64, tpu.core_type = #tpu.core_type<tc>, window_params = [{transform_indices = @transform_0, window_bounds = array<i64: 8, 4>}, {pipeline_mode = #tpu.pipeline_mode<synchronous>, transform_indices = @transform_1, window_bounds = array<i64: 19, 32>}, {transform_indices = @transform_2, window_bounds = array<i64: 8, 128>}]} {
    %0 = tpu.iota {dimensions = array<i32: 1>} : vector<8x19xi32>
    %c0 = arith.constant 0 : index
    %c0_0 = arith.constant 0 : index
    %1 = vector.load %arg2[%c0, %c0_0] : memref<19x32xf32, #tpu.memory_space<vmem>>, vector<19x32xf32>
    %c0_1 = arith.constant 0 : index
    %c0_2 = arith.constant 0 : index
    %2 = vector.load %arg1[%c0_1, %c0_2] : memref<8x4xi32, #tpu.memory_space<vmem>>, vector<8x1xi32>
    %3 = vector.broadcast %2 : vector<8x1xi32> to vector<8x19xi32>
    %4 = arith.cmpi eq, %3, %0 : vector<8x19xi32>
    %5 = arith.extui %4 : vector<8x19xi1> to vector<8x19xi32>
    %6 = arith.sitofp %5 : vector<8x19xi32> to vector<8x19xf32>
    %cst = arith.constant dense<0.000000e+00> : vector<8x32xf32>
    %7 = tpu.matmul %6, %1, %cst {dimension_numbers = #tpu.dot_dimension_numbers<[1], [0], [0], [1], [0, 0, 1, 1], [], []>} : vector<8x19xf32>, vector<19x32xf32>, vector<8x32xf32> -> vector<8x32xf32>
    %c0_3 = arith.constant 0 : index
    %c0_4 = arith.constant 0 : index
    %8 = vector.load %arg3[%c0_3, %c0_4] : memref<8x128xf32, #tpu.memory_space<vmem>>, vector<8x32xf32>
    tpu.vector_store %arg3[%c0_3, %c0_4], %7 {strides = array<i32>} : memref<8x128xf32, #tpu.memory_space<vmem>>, vector<8x32xf32>,
    %c0_5 = arith.constant 0 : index
    %c1 = arith.constant 1 : index
    %9 = vector.load %arg1[%c0_5, %c1] : memref<8x4xi32, #tpu.memory_space<vmem>>, vector<8x1xi32>
    %10 = vector.broadcast %9 : vector<8x1xi32> to vector<8x19xi32>
    %11 = arith.cmpi eq, %10, %0 : vector<8x19xi32>
    %12 = arith.extui %11 : vector<8x19xi1> to vector<8x19xi32>
    %13 = arith.sitofp %12 : vector<8x19xi32> to vector<8x19xf32>
    %cst_6 = arith.constant dense<0.000000e+00> : vector<8x32xf32>
    %14 = tpu.matmul %13, %1, %cst_6 {dimension_numbers = #tpu.dot_dimension_numbers<[1], [0], [0], [1], [0, 0, 1, 1], [], []>} : vector<8x19xf32>, vector<19x32xf32>, vector<8x32xf32> -> vector<8x32xf32>
    %c0_7 = arith.constant 0 : index
    %c32 = arith.constant 32 : index
    %15 = vector.load %arg3[%c0_7, %c32] : memref<8x128xf32, #tpu.memory_space<vmem>>, vector<8x32xf32>
    tpu.vector_store %arg3[%c0_7, %c32], %14 {strides = array<i32>} : memref<8x128xf32, #tpu.memory_space<vmem>>, vector<8x32xf32>,
    %c0_8 = arith.constant 0 : index
    %c2 = arith.constant 2 : index
    %16 = vector.load %arg1[%c0_8, %c2] : memref<8x4xi32, #tpu.memory_space<vmem>>, vector<8x1xi32>
    %17 = vector.broadcast %16 : vector<8x1xi32> to vector<8x19xi32>
    %18 = arith.cmpi eq, %17, %0 : vector<8x19xi32>
    %19 = arith.extui %18 : vector<8x19xi1> to vector<8x19xi32>
    %20 = arith.sitofp %19 : vector<8x19xi32> to vector<8x19xf32>
    %cst_9 = arith.constant dense<0.000000e+00> : vector<8x32xf32>
    %21 = tpu.matmul %20, %1, %cst_9 {dimension_numbers = #tpu.dot_dimension_numbers<[1], [0], [0], [1], [0, 0, 1, 1], [], []>} : vector<8x19xf32>, vector<19x32xf32>, vector<8x32xf32> -> vector<8x32xf32>
    %c0_10 = arith.constant 0 : index
    %c64 = arith.constant 64 : index
    %22 = vector.load %arg3[%c0_10, %c64] : memref<8x128xf32, #tpu.memory_space<vmem>>, vector<8x32xf32>
    tpu.vector_store %arg3[%c0_10, %c64], %21 {strides = array<i32>} : memref<8x128xf32, #tpu.memory_space<vmem>>, vector<8x32xf32>,
    %c0_11 = arith.constant 0 : index
    %c3 = arith.constant 3 : index
    %23 = vector.load %arg1[%c0_11, %c3] : memref<8x4xi32, #tpu.memory_space<vmem>>, vector<8x1xi32>
    %24 = vector.broadcast %23 : vector<8x1xi32> to vector<8x19xi32>
    %25 = arith.cmpi eq, %24, %0 : vector<8x19xi32>
    %26 = arith.extui %25 : vector<8x19xi1> to vector<8x19xi32>
    %27 = arith.sitofp %26 : vector<8x19xi32> to vector<8x19xf32>
    %cst_12 = arith.constant dense<0.000000e+00> : vector<8x32xf32>
    %28 = tpu.matmul %27, %1, %cst_12 {dimension_numbers = #tpu.dot_dimension_numbers<[1], [0], [0], [1], [0, 0, 1, 1], [], []>} : vector<8x19xf32>, vector<19x32xf32>, vector<8x32xf32> -> vector<8x32xf32>
    %c0_13 = arith.constant 0 : index
    %c96 = arith.constant 96 : index
    %29 = vector.load %arg3[%c0_13, %c96] : memref<8x128xf32, #tpu.memory_space<vmem>>, vector<8x32xf32>
    tpu.vector_store %arg3[%c0_13, %c96], %28 {strides = array<i32>} : memref<8x128xf32, #tpu.memory_space<vmem>>, vector<8x32xf32>,
    return
  }
  func.func @transform_0(%arg0: i32) -> (i32, i32) {
    %c0_i32 = arith.constant 0 : i32
    %c0_i32_0 = arith.constant 0 : i32
    return %arg0, %c0_i32 : i32, i32
  }
  func.func @transform_1(%arg0: i32) -> (i32, i32) {
    %c0_i32 = arith.constant 0 : i32
    %c0_i32_0 = arith.constant 0 : i32
    %c0_i32_1 = arith.constant 0 : i32
    return %c0_i32, %c0_i32_0 : i32, i32
  }
  func.func @transform_2(%arg0: i32) -> (i32, i32) {
    %c0_i32 = arith.constant 0 : i32
    %c0_i32_0 = arith.constant 0 : i32
    return %arg0, %c0_i32 : i32, i32
  }
}

</mosaic_0001>

<llo_original>
// kernel: tpu_custom_call.1
$region0: #{tpu_custom_call.1}
  #allocation0 [shape = 'u32[]', space=smem, size = 0x4, offset = 0x4, fixed_abs, tag = 'smem constant byte address 0x4 - core index']
  #allocation1 [shape = 'u32[72,128]{1,0:T(1,128)}', space=vmem, size = 0x9000, scoped, tag = 'internal scratch']
  %s0 = inlined_call_operand.vmem [shape: s32[8,4], index: 0, kind: input, shape index: {}]
  %s1 = inlined_call_operand.hbm [shape: f32[19,32], index: 1, kind: input, shape index: {}]
  %s2 = inlined_call_operand.hbm [shape: f32[8,128], index: 2, kind: output, shape index: {}]
  %s3 = sld [smem:[#allocation0]]
  $region22: #{tpu_custom_call.1} parent=0
    _
  %s5 = ssub.s32 1, %s3
  %s6 = scalar_select 0, %s5, %s3
  $region1: #{tpu_custom_call.1} parent=0
    #allocation2 [shape = 'u8[12288]{0}', space=vmem, size = 0x3000, scoped, tag = 'input window, operand 1, single buffered']
    #allocation3 [shape = 's32[1]{0}', space=sflag, size = 0x4, scoped, tag = 'scoped memory for tpu_custom_call.1']
    #allocation4 [shape = 's32[1]{0}', space=sflag, size = 0x4, scoped, tag = 'scoped memory for tpu_custom_call.1']
    #allocation5 [shape = 'u8[4096]{0}', space=vmem, size = 0x1000, scoped, tag = 'output window, operand 0, single buffered']
    %7 = vsyncpa [#allocation3], 0
    %8 = vsyncpa [#allocation4], 0
    // Predicated region
    $region2: #{tpu_custom_call.1} parent=1 // pred_check
      _
    $region3: #{tpu_custom_call.1} parent=1 // pred_check_branch
      %10 = sbr.rel (0) target = $region5
    $region4: #{tpu_custom_call.1} parent=1 // pred_region
      _
    $region5: #{tpu_custom_call.1} parent=1 // pred_fallthru
      _
    // Predicated region
    $region6: #{tpu_custom_call.1} parent=1 // pred_check
      _
    $region7: #{tpu_custom_call.1} parent=1 // pred_check_branch
      %12 = sbr.rel (0) target = $region9
    $region8: #{tpu_custom_call.1} parent=1 // pred_region
      %14 = vsyncadd [#allocation3], 0
      %s15 = sshll.u32 %s1, 4
      %s16 = int_to_ptr.hbm [resolvable:$true] %s15
      %s17 = sshll.u32 [#allocation2], 4
      %s18 = int_to_ptr.vmem [resolvable:$true] %s17
      %23 = dma.hbm_to_vmem [thread:$0]  %s16, 384, %s18, [#allocation3], 128, 128, 8
    $region9: #{tpu_custom_call.1} parent=1 // pred_fallthru
      _
    // Predicated region
    $region10: #{tpu_custom_call.1} parent=1 // pred_check
      _
    $region11: #{tpu_custom_call.1} parent=1 // pred_check_branch
      %25 = sbr.rel (0) target = $region13
    $region12: #{tpu_custom_call.1} parent=1 // pred_region
      %27 = dma.done [#allocation3], 384
    $region13: #{tpu_custom_call.1} parent=1 // pred_fallthru
      _
    %v28 = vlaneseq
    %v29 = vand.u32 %v28, 127
    %v30 = vld [vmem:[#allocation2] sm:$0xff]
    %v31 = vld [vmem:[#allocation2 + $0x8] sm:$0xff]
    %v32 = vld [vmem:[#allocation2 + $0x10] sm:$0x7]
    %v33 = vld [vmem:[%s0] sm:$0xff]
    %34 = vset.pattern.permute.xlu0 0
    %35 = vperm.xlu0 %34, %v33
    %v36 = vpop.permute.xlu0 %35
    %vm37 = vcmp.eq.s32.totalorder %v36, %v29
    %v38 = vsel %vm37, 1, 0
    %v39 = vcvt.s32.f32 %v38
    %vm40 = vcmask 154624
    %v42 = vsel %vm40, %v39, 0
    %vm44 = vcmask 1042432
    %v46 = vsel %vm44, %v32, 0
    %48 = vmatpush.msra.mxu0 0.0
    %49 = vmatpush.msra.mxu0 0.0
    %50 = vmatpush.msra.mxu0 0.0
    %51 = vmatpush.msra.mxu0 0.0
    %52 = vmatpush.msra.mxu0 0.0
    %53 = vmatpush.msra.mxu0 0.0
    %54 = vmatpush.msra.mxu0 0.0
    %55 = vmatpush.msra.mxu0 0.0
    %56 = vmatpush.msra.mxu0 0.0
    %57 = vmatpush.msra.mxu0 0.0
    %58 = vmatpush.msra.mxu0 0.0
    %59 = vmatpush.msra.mxu0 0.0
    %60 = vmatpush.msra.mxu0 0.0
    %61 = vmatpush.msra.mxu0 %v46
    %62 = vmatpush.msra.mxu0 %v31
    %63 = vmatpush.msra.mxu0 %v30
    %64 = vmatmul.f32.gmra.mxu0 %v42
    %v65 = vpop.f32.mrf.mxu0
    %v66 = vadd.f32 0.0, %v65
    %67 = vdwg.mxu0
    %vm68 = vcmask 261120
    %69 = vst.msk [vmem:[#allocation5] sm:$0xff] %vm68, %v66
    %v70 = vld [vmem:[%s0] sm:$0xff]
    %71 = vset.pattern.permute.xlu0 1
    %72 = vperm.xlu0 %71, %v70
    %v73 = vpop.permute.xlu0 %72
    %vm74 = vcmp.eq.s32.totalorder %v73, %v29
    %v75 = vsel %vm74, 1, 0
    %v76 = vcvt.s32.f32 %v75
    %v78 = vsel %vm40, %v76, 0
    %80 = vmatpush.msra.mxu0 0.0
    %81 = vmatpush.msra.mxu0 0.0
    %82 = vmatpush.msra.mxu0 0.0
    %83 = vmatpush.msra.mxu0 0.0
    %84 = vmatpush.msra.mxu0 0.0
    %85 = vmatpush.msra.mxu0 0.0
    %86 = vmatpush.msra.mxu0 0.0
    %87 = vmatpush.msra.mxu0 0.0
    %88 = vmatpush.msra.mxu0 0.0
    %89 = vmatpush.msra.mxu0 0.0
    %90 = vmatpush.msra.mxu0 0.0
    %91 = vmatpush.msra.mxu0 0.0
    %92 = vmatpush.msra.mxu0 0.0
    %93 = vmatpush.msra.mxu0 %v46
    %94 = vmatpush.msra.mxu0 %v31
    %95 = vmatpush.msra.mxu0 %v30
    %96 = vmatmul.f32.gmra.mxu0 %v78
    %v97 = vpop.f32.mrf.mxu0
    %v98 = vadd.f32 0.0, %v97
    %99 = vdwg.mxu0
    %101 = vrot.lane.b32.xlu0 %v98, 32
    %v102 = vpop.permute.xlu0 %101
    %vm104 = vcmask 523520
    %105 = vst.msk [vmem:[#allocation5] sm:$0xff] %vm104, %v102
    %v106 = vld [vmem:[%s0] sm:$0xff]
    %107 = vset.pattern.permute.xlu0 2
    %108 = vperm.xlu0 %107, %v106
    %v109 = vpop.permute.xlu0 %108
    %vm110 = vcmp.eq.s32.totalorder %v109, %v29
    %v111 = vsel %vm110, 1, 0
    %v112 = vcvt.s32.f32 %v111
    %v114 = vsel %vm40, %v112, 0
    %116 = vmatpush.msra.mxu0 0.0
    %117 = vmatpush.msra.mxu0 0.0
    %118 = vmatpush.msra.mxu0 0.0
    %119 = vmatpush.msra.mxu0 0.0
    %120 = vmatpush.msra.mxu0 0.0
    %121 = vmatpush.msra.mxu0 0.0
    %122 = vmatpush.msra.mxu0 0.0
    %123 = vmatpush.msra.mxu0 0.0
    %124 = vmatpush.msra.mxu0 0.0
    %125 = vmatpush.msra.mxu0 0.0
    %126 = vmatpush.msra.mxu0 0.0
    %127 = vmatpush.msra.mxu0 0.0
    %128 = vmatpush.msra.mxu0 0.0
    %129 = vmatpush.msra.mxu0 %v46
    %130 = vmatpush.msra.mxu0 %v31
    %131 = vmatpush.msra.mxu0 %v30
    %132 = vmatmul.f32.gmra.mxu0 %v114
    %v133 = vpop.f32.mrf.mxu0
    %v134 = vadd.f32 0.0, %v133
    %135 = vdwg.mxu0
    %137 = vrot.lane.b32.xlu0 %v134, 64
    %v138 = vpop.permute.xlu0 %137
    %vm140 = vcmask 785920
    %141 = vst.msk [vmem:[#allocation5] sm:$0xff] %vm140, %v138
    %v142 = vld [vmem:[%s0] sm:$0xff]
    %143 = vset.pattern.permute.xlu0 3
    %144 = vperm.xlu0 %143, %v142
    %v145 = vpop.permute.xlu0 %144
    %vm146 = vcmp.eq.s32.totalorder %v145, %v29
    %v147 = vsel %vm146, 1, 0
    %v148 = vcvt.s32.f32 %v147
    %v150 = vsel %vm40, %v148, 0
    %152 = vmatpush.msra.mxu0 0.0
    %153 = vmatpush.msra.mxu0 0.0
    %154 = vmatpush.msra.mxu0 0.0
    %155 = vmatpush.msra.mxu0 0.0
    %156 = vmatpush.msra.mxu0 0.0
    %157 = vmatpush.msra.mxu0 0.0
    %158 = vmatpush.msra.mxu0 0.0
    %159 = vmatpush.msra.mxu0 0.0
    %160 = vmatpush.msra.mxu0 0.0
    %161 = vmatpush.msra.mxu0 0.0
    %162 = vmatpush.msra.mxu0 0.0
    %163 = vmatpush.msra.mxu0 0.0
    %164 = vmatpush.msra.mxu0 0.0
    %165 = vmatpush.msra.mxu0 %v46
    %166 = vmatpush.msra.mxu0 %v31
    %167 = vmatpush.msra.mxu0 %v30
    %168 = vmatmul.f32.gmra.mxu0 %v150
    %v169 = vpop.f32.mrf.mxu0
    %v170 = vadd.f32 0.0, %v169
    %171 = vdwg.mxu0
    %173 = vrot.lane.b32.xlu0 %v170, 96
    %v174 = vpop.permute.xlu0 %173
    %vm176 = vcmask 1048320
    %177 = vst.msk [vmem:[#allocation5] sm:$0xff] %vm176, %v174
    // Predicated region
    $region14: #{tpu_custom_call.1} parent=1 // pred_check
      _
    $region15: #{tpu_custom_call.1} parent=1 // pred_check_branch
      %179 = sbr.rel (0) target = $region17
    $region16: #{tpu_custom_call.1} parent=1 // pred_region
      %181 = vsyncadd [#allocation4], 0
      %s183 = sshll.u32 [#allocation5], 4
      %s184 = int_to_ptr.vmem [resolvable:$true] %s183
      %s185 = sshll.u32 %s2, 4
      %s186 = int_to_ptr.hbm [resolvable:$true] %s185
      %188 = dma.vmem_to_hbm [thread:$0]  %s184, 128, %s186, [#allocation4]
    $region17: #{tpu_custom_call.1} parent=1 // pred_fallthru
      _
    // Predicated region
    $region18: #{tpu_custom_call.1} parent=1 // pred_check
      _
    $region19: #{tpu_custom_call.1} parent=1 // pred_check_branch
      %190 = sbr.rel (0) target = $region21
    $region20: #{tpu_custom_call.1} parent=1 // pred_region
      %192 = dma.done [#allocation4], 128
    $region21: #{tpu_custom_call.1} parent=1 // pred_fallthru
      _
    %193 = vsyncpa [#allocation3], 1
    %194 = vsyncpa [#allocation4], 1

</llo_original>
